<compile_context>
chip_gen: v7x
topology: tpu7x:2x2x1
jax: 0.10.0
libtpu: 0.0.40
codegen_flags: <defaults>
</compile_context>

<pallas_src>
import functools

import jax
import jax.numpy as jnp
from jax import lax
from jax.experimental import pallas as pl
from jax.experimental.pallas import tpu as pltpu


# ---------------------------------------------------------------------------
# Kernels
# ---------------------------------------------------------------------------

def _sgc_shared_kernel(a_ref, x_ref, w_ref, o_ref, xw_ref, *, tb, f, recompute):
    """Shared (2-D) adjacency, lane-folded batches.

    a_ref : (TM, N)      row tile of the shared adjacency
    x_ref : (N, TB*F)    TB batches folded into lanes (resident across rows)
    w_ref : (F, F)       weight pre-transposed to (in, out) layout (resident)
    o_ref : (TM, TB*F)   lane-dense output tile
    xw_ref: (N, TB*F)    VMEM scratch holding x @ W^T in the compute dtype
    """
    r = pl.program_id(1)

    def compute_xw():
        for t in range(tb):                        # static unroll; TB is small
            lo, hi = t * f, (t + 1) * f
            xw = jnp.dot(x_ref[:, lo:hi], w_ref[...],
                         preferred_element_type=jnp.float32)
            # Cast back to the compute dtype so the dominant A-matmul below
            # runs with (bf16 x bf16 -> f32) MXU operands on the bf16 path.
            xw_ref[:, lo:hi] = xw.astype(xw_ref.dtype)

    if recompute:
        compute_xw()                               # row axis is "parallel"
    else:
        pl.when(r == 0)(compute_xw)                # once per batch tile

    h = jnp.dot(a_ref[...], xw_ref[...], preferred_element_type=jnp.float32)
    o_ref[...] = jnp.tanh(h).astype(o_ref.dtype)


def _sgc_batched_kernel(a_ref, x_ref, w_ref, o_ref, xw_ref, *, recompute):
    """Per-batch (3-D) adjacency, row-tiled A.

    a_ref : (1, TM, N), x_ref: (1, N, F), w_ref: (F, F) pre-transposed,
    o_ref : (1, TM, F), xw_ref: (N, F) compute-dtype scratch.
    """
    r = pl.program_id(1)

    def compute_xw():
        xw = jnp.dot(x_ref[0], w_ref[...], preferred_element_type=jnp.float32)
        xw_ref[...] = xw.astype(xw_ref.dtype)      # bf16 operands for A-matmul

    if recompute:
        compute_xw()
    else:
        pl.when(r == 0)(compute_xw)

    h = jnp.dot(a_ref[0], xw_ref[...], preferred_element_type=jnp.float32)
    o_ref[0] = jnp.tanh(h).astype(o_ref.dtype)


# ---------------------------------------------------------------------------
# Planning helpers
# ---------------------------------------------------------------------------

def _divisors(n):
    return [d for d in range(1, n + 1) if n % d == 0]


def _vmem_budget_bytes():
    """Per-generation VMEM budget with headroom (~48 MiB v7x, ~96 MiB v5e/v6e)."""
    try:
        cap = int(pltpu.get_tpu_info().vmem_capacity_bytes)
    except Exception:
        cap = 64 << 20          # assume the smallest part (v7x) if unknown
    return (cap * 3) // 4


def _vmem_limit(needed, budget):
    return int(max(needed, min(budget, max(2 * needed, 32 << 20))))


def _plan_shared(B, N, F, itemsize, budget):
    """Pick (TB, TM) for the shared-adjacency, lane-folded kernel."""
    # TB: batches folded into lanes. Lane constraint: TB*F % 128 == 0 or TB == B.
    x_target = (4 << 20) if budget <= (48 << 20) else (12 << 20)
    aligned = [d for d in _divisors(B) if (d * F) % 128 == 0 or d == B]
    small = [d for d in aligned if d <= 64] or aligned   # bound static unroll
    fitting = [d for d in small if N * d * F * itemsize <= x_target]
    TB = max(fitting) if fitting else min(small)

    # TM: A row-tile (sublane-aligned divisor of N, or N itself).
    sub = max(8, 32 // itemsize)                   # 8 for f32, 16 for bf16
    tm_cands = [d for d in _divisors(N) if d % sub == 0]
    if N not in tm_cands:
        tm_cands.append(N)
    if B // TB < 2:                                # expose >=2 grid steps
        split = [d for d in tm_cands if N // d >= 2]
        if split:
            tm_cands = split
    a_target = min(8 << 20, max(budget // 6, 1 << 20))
    fit = [d for d in tm_cands if d * N * itemsize <= a_target]
    TM = max(fit) if fit else min(tm_cands)
    return TB, TM


def _plan_batched(B, N, itemsize, budget):
    sub = max(8, 32 // itemsize)
    tm_cands = [d for d in _divisors(N) if d % sub == 0]
    if N not in tm_cands:
        tm_cands.append(N)
    if B < 2:
        split = [d for d in tm_cands if N // d >= 2]
        if split:
            tm_cands = split
    a_target = min(8 << 20, max(budget // 6, 1 << 20))
    fit = [d for d in tm_cands if d * N * itemsize <= a_target]
    return max(fit) if fit else min(tm_cands)


# ---------------------------------------------------------------------------
# Public wrapper
# ---------------------------------------------------------------------------

def sgc_forward(x, A, W, *, compute_dtype=None):
    """SGC forward.

    x: (B, N, F), A: (N, N) or (B, N, N), W: (F, F) torch nn.Linear layout
    (out_features, in_features).  compute_dtype: optionally run both matmuls
    with bf16 operands (f32 accumulation) for v5e/v6e/v7x bf16-native MXUs.
    """
    B, N, F = x.shape
    out_dtype = x.dtype
    cdtype = jnp.dtype(compute_dtype) if compute_dtype is not None else jnp.dtype(x.dtype)
    itemsize = cdtype.itemsize
    out_itemsize = jnp.dtype(out_dtype).itemsize

    Wt = jnp.swapaxes(W, 0, 1).astype(cdtype)      # (in, out) layout, hoisted
    A = A.astype(cdtype)
    xc = x.astype(cdtype)

    budget = _vmem_budget_bytes()

    flops = 2 * B * (N * N * F + N * F * F)
    transcendentals = B * N * F
    bytes_accessed = int(A.size * itemsize + xc.size * itemsize
                         + Wt.size * itemsize + B * N * F * out_itemsize)
    cost = pl.CostEstimate(flops=flops, transcendentals=transcendentals,
                           bytes_accessed=bytes_accessed)

    if A.ndim == 2:
        # ---- shared adjacency: lane-folded batches + row-tiled A ----
        TB, TM = _plan_shared(B, N, F, itemsize, budget)
        grid_b, grid_r = B // TB, N // TM
        # If the batch axis has a single step, recompute xw per row step (when
        # the redundant W-matmul flops are small) so the row axis can be
        # marked "parallel" and shard across v7x's two TensorCores.
        recompute = (grid_b == 1 and grid_r >= 2 and F * (grid_r - 1) <= N)

        # Layout plumbing (wrapper-side): fold batches into lanes.
        x_f = jnp.transpose(xc, (1, 0, 2)).reshape(N, B * F)

        needed = (2 * (TM * N + N * TB * F + F * F) * itemsize
                  + 2 * TM * TB * F * out_itemsize
                  + N * TB * F * itemsize)

        kernel = functools.partial(_sgc_shared_kernel, tb=TB, f=F,
                                   recompute=recompute)
        out_f = pl.pallas_call(
            kernel,
            out_shape=jax.ShapeDtypeStruct((N, B * F), out_dtype),
            grid_spec=pltpu.PrefetchScalarGridSpec(
                num_scalar_prefetch=0,
                grid=(grid_b, grid_r),
                in_specs=[
                    pl.BlockSpec((TM, N), lambda b, r: (r, 0)),      # A rows
                    pl.BlockSpec((N, TB * F), lambda b, r: (0, b)),  # x (resident across r)
                    pl.BlockSpec((F, F), lambda b, r: (0, 0)),       # W^T (resident)
                ],
                out_specs=pl.BlockSpec((TM, TB * F), lambda b, r: (r, b)),
                scratch_shapes=[pltpu.VMEM((N, TB * F), cdtype)],
            ),
            compiler_params=pltpu.CompilerParams(
                dimension_semantics=("parallel",
                                     "parallel" if recompute else "arbitrary"),
                vmem_limit_bytes=_vmem_limit(needed, budget)),
            cost_estimate=cost,
        )(A, x_f, Wt)
        # Un-fold lanes back to (B, N, F).
        return jnp.transpose(out_f.reshape(N, B, F), (1, 0, 2))

    # ---- per-batch adjacency (3-D A): row-tiled A, xw cached per batch ----
    TM = _plan_batched(B, N, itemsize, budget)
    grid_r = N // TM
    recompute = (B == 1 and grid_r >= 2 and F * (grid_r - 1) <= N)
    needed = (2 * (TM * N + N * F + F * F) * itemsize
              + 2 * TM * F * out_itemsize + N * F * itemsize)

    kernel = functools.partial(_sgc_batched_kernel, recompute=recompute)
    return pl.pallas_call(
        kernel,
        out_shape=jax.ShapeDtypeStruct((B, N, F), out_dtype),
        grid_spec=pltpu.PrefetchScalarGridSpec(
            num_scalar_prefetch=0,
            grid=(B, grid_r),
            in_specs=[
                pl.BlockSpec((1, TM, N), lambda b, r: (b, r, 0)),  # A[b] rows
                pl.BlockSpec((1, N, F), lambda b, r: (b, 0, 0)),   # x[b] (resident across r)
                pl.BlockSpec((F, F), lambda b, r: (0, 0)),         # W^T (resident)
            ],
            out_specs=pl.BlockSpec((1, TM, F), lambda b, r: (b, r, 0)),
            scratch_shapes=[pltpu.VMEM((N, F), cdtype)],
        ),
        compiler_params=pltpu.CompilerParams(
            dimension_semantics=("parallel",
                                 "parallel" if recompute else "arbitrary"),
            vmem_limit_bytes=_vmem_limit(needed, budget)),
        cost_estimate=cost,
    )(A, xc, Wt)


# ---------------------------------------------------------------------------
# Self-test
# ---------------------------------------------------------------------------

if __name__ == "__main__":
    key = jax.random.PRNGKey(0)
    k_x, k_a, k_w = jax.random.split(key, 3)

    B, N, nfeat = 2, 16, 32

    x = jax.random.normal(k_x, (B, N, nfeat), dtype=jnp.float32)
    A = jax.random.uniform(k_a, (N, N), dtype=jnp.float32)
    # nn.Linear(nfeat, nfeat, bias=False) weight: (out, in)
    bound = 1.0 / (nfeat ** 0.5)
    W = jax.random.uniform(k_w, (nfeat, nfeat), dtype=jnp.float32,
                           minval=-bound, maxval=bound)

    # f32-accurate reference (PyTorch op order), shared-A path.
    ref = jnp.tanh(
        jnp.einsum('ij,bjk->bik', A, x, precision=lax.Precision.HIGHEST)
        @ W.T)

    out = sgc_forward(x, A, W)
    jax.block_until_ready(out)
    assert out.shape == (B, N, nfeat)
    assert jnp.allclose(out, ref, atol=1e-4, rtol=1e-4)

    # Batched-adjacency path (len(A.shape) == 3).
    A3 = jax.random.uniform(k_a, (B, N, N), dtype=jnp.float32)
    ref3 = jnp.tanh(
        jnp.einsum('bij,bjk->bik', A3, x, precision=lax.Precision.HIGHEST)
        @ W.T)
    out3 = sgc_forward(x, A3, W)
    jax.block_until_ready(out3)
    assert jnp.allclose(out3, ref3, atol=1e-4, rtol=1e-4)

    # bf16 compute path (bf16 MXU operands for BOTH matmuls, f32 accumulation).
    out_bf16 = sgc_forward(x, A, W, compute_dtype=jnp.bfloat16)
    jax.block_until_ready(out_bf16)
    assert out_bf16.shape == (B, N, nfeat)
    assert float(jnp.max(jnp.abs(out_bf16 - ref))) < 0.25

    out3_bf16 = sgc_forward(x, A3, W, compute_dtype=jnp.bfloat16)
    jax.block_until_ready(out3_bf16)
    assert float(jnp.max(jnp.abs(out3_bf16 - ref3))) < 0.25

    print("KERNEL_OK")
</pallas_src>

<mosaic_0001>
module attributes {stable_mosaic.version = 11 : i64} {
  func.func @_sgc_shared_kernel(%arg0: i32, %arg1: i32, %arg2: memref<8x16xf32, #tpu.memory_space<vmem>>, %arg3: memref<16x64xf32, #tpu.memory_space<vmem>>, %arg4: memref<32x32xf32, #tpu.memory_space<vmem>>, %arg5: memref<8x64xf32, #tpu.memory_space<vmem>>, %arg6: memref<16x64xf32, #tpu.memory_space<vmem>>) attributes {dimension_semantics = [#tpu.dimension_semantics<parallel>, #tpu.dimension_semantics<arbitrary>], iteration_bounds = array<i64: 1, 2>, scalar_prefetch = 0 : i64, scratch_operands = 1 : i64, tpu.core_type = #tpu.core_type<tc>, window_params = [{transform_indices = @transform_0, window_bounds = array<i64: 8, 16>}, {transform_indices = @transform_1, window_bounds = array<i64: 16, 64>}, {pipeline_mode = #tpu.pipeline_mode<synchronous>, transform_indices = @transform_2, window_bounds = array<i64: 32, 32>}, {transform_indices = @transform_3, window_bounds = array<i64: 8, 64>}]} {
    %c0_i32 = arith.constant 0 : i32
    %0 = arith.cmpi eq, %arg1, %c0_i32 : i32
    %1 = arith.extui %0 : i1 to i32
    %c0_i32_0 = arith.constant 0 : i32
    %2 = arith.cmpi ne, %1, %c0_i32_0 : i32
    scf.if %2 {
      %c0_6 = arith.constant 0 : index
      %c0_7 = arith.constant 0 : index
      %8 = vector.load %arg3[%c0_6, %c0_7] : memref<16x64xf32, #tpu.memory_space<vmem>>, vector<16x32xf32>
      %c0_8 = arith.constant 0 : index
      %c0_9 = arith.constant 0 : index
      %9 = vector.load %arg4[%c0_8, %c0_9] : memref<32x32xf32, #tpu.memory_space<vmem>>, vector<32x32xf32>
      %cst_10 = arith.constant dense<0.000000e+00> : vector<16x32xf32>
      %10 = tpu.matmul %8, %9, %cst_10 {dimension_numbers = #tpu.dot_dimension_numbers<[1], [0], [0], [1], [0, 0, 1, 1], [], []>} : vector<16x32xf32>, vector<32x32xf32>, vector<16x32xf32> -> vector<16x32xf32>
      %c0_11 = arith.constant 0 : index
      %c0_12 = arith.constant 0 : index
      %11 = vector.load %arg6[%c0_11, %c0_12] : memref<16x64xf32, #tpu.memory_space<vmem>>, vector<16x32xf32>
      tpu.vector_store %arg6[%c0_11, %c0_12], %10 {strides = array<i32>} : memref<16x64xf32, #tpu.memory_space<vmem>>, vector<16x32xf32>,
      %c0_13 = arith.constant 0 : index
      %c32 = arith.constant 32 : index
      %12 = vector.load %arg3[%c0_13, %c32] : memref<16x64xf32, #tpu.memory_space<vmem>>, vector<16x32xf32>
      %c0_14 = arith.constant 0 : index
      %c0_15 = arith.constant 0 : index
      %13 = vector.load %arg4[%c0_14, %c0_15] : memref<32x32xf32, #tpu.memory_space<vmem>>, vector<32x32xf32>
      %cst_16 = arith.constant dense<0.000000e+00> : vector<16x32xf32>
      %14 = tpu.matmul %12, %13, %cst_16 {dimension_numbers = #tpu.dot_dimension_numbers<[1], [0], [0], [1], [0, 0, 1, 1], [], []>} : vector<16x32xf32>, vector<32x32xf32>, vector<16x32xf32> -> vector<16x32xf32>
      %c0_17 = arith.constant 0 : index
      %c32_18 = arith.constant 32 : index
      %15 = vector.load %arg6[%c0_17, %c32_18] : memref<16x64xf32, #tpu.memory_space<vmem>>, vector<16x32xf32>
      tpu.vector_store %arg6[%c0_17, %c32_18], %14 {strides = array<i32>} : memref<16x64xf32, #tpu.memory_space<vmem>>, vector<16x32xf32>,
    } else {
    }
    %c0 = arith.constant 0 : index
    %c0_1 = arith.constant 0 : index
    %3 = vector.load %arg2[%c0, %c0_1] : memref<8x16xf32, #tpu.memory_space<vmem>>, vector<8x16xf32>
    %c0_2 = arith.constant 0 : index
    %c0_3 = arith.constant 0 : index
    %4 = vector.load %arg6[%c0_2, %c0_3] : memref<16x64xf32, #tpu.memory_space<vmem>>, vector<16x64xf32>
    %cst = arith.constant dense<0.000000e+00> : vector<8x64xf32>
    %5 = tpu.matmul %3, %4, %cst {dimension_numbers = #tpu.dot_dimension_numbers<[1], [0], [0], [1], [0, 0, 1, 1], [], []>} : vector<8x16xf32>, vector<16x64xf32>, vector<8x64xf32> -> vector<8x64xf32>
    %6 = math.tanh %5 : vector<8x64xf32>
    %c0_4 = arith.constant 0 : index
    %c0_5 = arith.constant 0 : index
    %7 = vector.load %arg5[%c0_4, %c0_5] : memref<8x64xf32, #tpu.memory_space<vmem>>, vector<8x64xf32>
    tpu.vector_store %arg5[%c0_4, %c0_5], %6 {strides = array<i32>} : memref<8x64xf32, #tpu.memory_space<vmem>>, vector<8x64xf32>,
    return
  }
  func.func @transform_0(%arg0: i32, %arg1: i32) -> (i32, i32) {
    %c0_i32 = arith.constant 0 : i32
    %c0_i32_0 = arith.constant 0 : i32
    return %arg1, %c0_i32 : i32, i32
  }
  func.func @transform_1(%arg0: i32, %arg1: i32) -> (i32, i32) {
    %c0_i32 = arith.constant 0 : i32
    %c0_i32_0 = arith.constant 0 : i32
    return %c0_i32, %arg0 : i32, i32
  }
  func.func @transform_2(%arg0: i32, %arg1: i32) -> (i32, i32) {
    %c0_i32 = arith.constant 0 : i32
    %c0_i32_0 = arith.constant 0 : i32
    %c0_i32_1 = arith.constant 0 : i32
    return %c0_i32, %c0_i32_0 : i32, i32
  }
  func.func @transform_3(%arg0: i32, %arg1: i32) -> (i32, i32) {
    %c0_i32 = arith.constant 0 : i32
    return %arg1, %arg0 : i32, i32
  }
}

</mosaic_0001>

<llo_original>
// kernel: tpu_custom_call.1
$region0: #{tpu_custom_call.1}
  #allocation0 [shape = 'u32[]', space=smem, size = 0x4, offset = 0x4, fixed_abs, tag = 'smem constant byte address 0x4 - core index']
  #allocation1 [shape = 'u32[144,128]{1,0:T(1,128)}', space=vmem, size = 0x12000, scoped, tag = 'internal scratch']
  #allocation2 [shape = 'f32[16,64]{1,0:T(8,128)}', space=vmem, size = 0x2000, scoped, tag = 'scratch operand']
  %s0 = inlined_call_operand.hbm [shape: f32[16,16], index: 0, kind: input, shape index: {}]
  %s1 = inlined_call_operand.hbm [shape: f32[16,64], index: 1, kind: input, shape index: {}]
  %s2 = inlined_call_operand.hbm [shape: f32[32,32], index: 2, kind: input, shape index: {}]
  %s3 = inlined_call_operand.hbm [shape: f32[16,64], index: 3, kind: output, shape index: {}]
  %s4 = sld [smem:[#allocation0]]
  $region61: #{tpu_custom_call.1} parent=0
    _
  %s6 = ssub.s32 1, %s4
  %s7 = scalar_select 0, %s6, %s4
  $region1: #{tpu_custom_call.1} parent=0
    #allocation3 [shape = 'u8[8192]{0}', space=vmem, size = 0x2000, scoped, tag = 'input window, operand 0']
    #allocation4 [shape = 's32[2]{0}', space=sflag, size = 0x8, scoped, tag = 'scoped memory for tpu_custom_call.1']
    #allocation5 [shape = 's32[2]{0}', space=sflag, size = 0x8, scoped, tag = 'scoped memory for tpu_custom_call.1']
    #allocation6 [shape = 'u8[8192]{0}', space=vmem, size = 0x2000, scoped, tag = 'input window, operand 1, single buffered']
    #allocation7 [shape = 's32[1]{0}', space=sflag, size = 0x4, scoped, tag = 'scoped memory for tpu_custom_call.1']
    #allocation8 [shape = 'u8[16384]{0}', space=vmem, size = 0x4000, scoped, tag = 'input window, operand 2, single buffered']
    #allocation9 [shape = 'u8[8192]{0}', space=vmem, size = 0x2000, scoped, tag = 'output window, operand 0']
    %8 = vsyncpa [#allocation4], 0
    %s9 = scalar_lea.sflag [#allocation4], 1
    %10 = vsyncpa %s9, 0
    %11 = vsyncpa [#allocation7], 0
    %12 = vsyncpa [#allocation5], 0
    %s13 = scalar_lea.sflag [#allocation5], 1
    %14 = vsyncpa %s13, 0
    loop: start=0, step=1, limit=4
    $region2: #{tpu_custom_call.1} parent=1 // loop_pre_header
      _
    $region3: #{tpu_custom_call.1} parent=1 // loop_header
      %s16 = sphi 0, %s20
      %p17 = scmp.ge.s32.totalorder %s16, 4
      %s23 = sphi 0, %s35
      %s24 = sphi 0, %s31
      %s25 = sphi 0, %s23
      %s26 = sphi 0, %s24
      %s27 = sphi 0, %s25
      %s28 = sphi 0, %s26
      %s38 = sphi 0, %s40
      %s41 = sphi 0, %s38
      %s42 = sphi 0, %s41
      %s58 = sphi 0, %s42
      %s64 = sphi 0, %s66
      %s67 = sphi 0, %s64
      %s68 = sphi 0, %s67
      %s84 = sphi 0, %s68
      %s88 = sphi 0, %s88
      %s90 = sphi 0, %s88
      %s91 = sphi 0, %s90
      %s105 = sphi 0, %s91
      %s113 = sphi 0, %s115
      %s116 = sphi 0, %s113
      %s117 = sphi 0, %s116
      %s133 = sphi 0, %s117
    $region4: #{tpu_custom_call.1} parent=1 // loop_header_branch
      %19 = sbr.rel (%p17) target = $region8
    $region5: #{tpu_custom_call.1} parent=1 // loop_body
      %s21 = ssub.s32 %s16, 1
      %s22 = ssub.s32 %s16, 2
      %s29 = sadd.s32 1, %s24
      %p30 = scmp.ge.s32.totalorder %s29, 2
      %s31 = scalar_select %p30, 0, %s29
      %s32 = sadd.s32 1, %s23
      %s33 = scalar_select %p30, %s32, %s23
      %p34 = scmp.ge.s32.totalorder %s33, 1
      %s35 = scalar_select %p34, 0, %s33
      %s36 = ssub.s32 %s24, %s31
      %p37 = scmp.eq.s32.totalorder %s36, 0
      %s39 = sadd.s32 %s38, 1
      %s40 = scalar_select %p37, %s38, %s39
      %p43 = pneg %p37
      %p44 = scmp.eq.s32.totalorder %s16, 1
      %p45 = por %p43, %p44
      %p46 = scmp.ne.s32.totalorder %s38, %s41
      %p47 = scmp.eq.s32.totalorder %s16, 0
      %p48 = por %p46, %p47
      %p49 = scmp.ne.s32.totalorder %s38, %s41
      %p50 = scmp.eq.s32.totalorder %s21, 1
      %p51 = por %p49, %p50
      %p52 = scmp.ne.s32.totalorder %s41, %s42
      %p53 = scmp.eq.s32.totalorder %s21, 0
      %p54 = por %p52, %p53
      %p55 = scmp.ne.s32.totalorder %s41, %s42
      %p56 = scmp.eq.s32.totalorder %s22, 1
      %p57 = por %p55, %p56
      %p59 = scmp.ne.s32.totalorder %s42, %s58
      %p60 = scmp.eq.s32.totalorder %s22, 0
      %p61 = por %p59, %p60
      %s62 = ssub.s32 %s23, %s35
      %p63 = scmp.eq.s32.totalorder %s62, 0
      %s65 = sadd.s32 %s64, 1
      %s66 = scalar_select %p63, %s64, %s65
      %p69 = pneg %p63
      %p70 = scmp.eq.s32.totalorder %s16, 1
      %p71 = por %p69, %p70
      %p72 = scmp.ne.s32.totalorder %s64, %s67
      %p73 = scmp.eq.s32.totalorder %s16, 0
      %p74 = por %p72, %p73
      %p75 = scmp.ne.s32.totalorder %s64, %s67
      %p76 = scmp.eq.s32.totalorder %s21, 1
      %p77 = por %p75, %p76
      %p78 = scmp.ne.s32.totalorder %s67, %s68
      %p79 = scmp.eq.s32.totalorder %s21, 0
      %p80 = por %p78, %p79
      %p81 = scmp.ne.s32.totalorder %s67, %s68
      %p82 = scmp.eq.s32.totalorder %s22, 1
      %p83 = por %p81, %p82
      %p85 = scmp.ne.s32.totalorder %s68, %s84
      %p86 = scmp.eq.s32.totalorder %s22, 0
      %p87 = por %p85, %p86
      %s89 = sadd.s32 %s88, 1
      %p92 = scmp.eq.s32.totalorder %s16, 1
      %p93 = scmp.ne.s32.totalorder %s88, %s90
      %p94 = scmp.eq.s32.totalorder %s16, 0
      %p95 = por %p93, %p94
      %p96 = scmp.ne.s32.totalorder %s88, %s90
      %p97 = scmp.eq.s32.totalorder %s21, 1
      %p98 = por %p96, %p97
      %p99 = scmp.ne.s32.totalorder %s90, %s91
      %p100 = scmp.eq.s32.totalorder %s21, 0
      %p101 = por %p99, %p100
      %p102 = scmp.ne.s32.totalorder %s90, %s91
      %p103 = scmp.eq.s32.totalorder %s22, 1
      %p104 = por %p102, %p103
      %p106 = scmp.ne.s32.totalorder %s91, %s105
      %p107 = scmp.eq.s32.totalorder %s22, 0
      %p108 = por %p106, %p107
      %s109 = ssub.s32 %s24, %s31
      %s110 = ssub.s32 %s23, %s35
      %s111 = sor.u32 %s109, %s110
      %p112 = scmp.eq.s32.totalorder %s111, 0
      %s114 = sadd.s32 %s113, 1
      %s115 = scalar_select %p112, %s113, %s114
      %p118 = pneg %p112
      %p119 = scmp.eq.s32.totalorder %s16, 1
      %p120 = por %p118, %p119
      %p121 = scmp.ne.s32.totalorder %s113, %s116
      %p122 = scmp.eq.s32.totalorder %s16, 0
      %p123 = por %p121, %p122
      %p124 = scmp.ne.s32.totalorder %s113, %s116
      %p125 = scmp.eq.s32.totalorder %s21, 1
      %p126 = por %p124, %p125
      %p127 = scmp.ne.s32.totalorder %s116, %s117
      %p128 = scmp.eq.s32.totalorder %s21, 0
      %p129 = por %p127, %p128
      %p130 = scmp.ne.s32.totalorder %s116, %s117
      %p131 = scmp.eq.s32.totalorder %s22, 1
      %p132 = por %p130, %p131
      %p134 = scmp.ne.s32.totalorder %s117, %s133
      %p135 = scmp.eq.s32.totalorder %s22, 0
      %p136 = por %p134, %p135
      %p137 = scmp.le.s32.totalorder 1, %s16
      %p138 = scmp.lt.s32.totalorder %s16, 3
      %p139 = pnand %p137, %p138
      %p140 = pneg %p139
      // Predicated region
      $region9: #{tpu_custom_call.1} parent=5 // pred_check
        _
      $region10: #{tpu_custom_call.1} parent=5 // pred_check_branch
        %142 = sbr.rel (%p139) target = $region12
      $region11: #{tpu_custom_call.1} parent=5 // pred_region
        %s143 = ssub.s32 %s16, 1
        // Predicated region
        $region13: #{tpu_custom_call.1} parent=11 // pred_check
          %p144 = pneg %p80
        $region14: #{tpu_custom_call.1} parent=11 // pred_check_branch
          %146 = sbr.rel (%p144) target = $region16
        $region15: #{tpu_custom_call.1} parent=11 // pred_region
          %s148 = ssub.s32 256, 256
          %149 = vsyncadd [#allocation7], %s148
          %s150 = smul.addr %s25, 128
          %s151 = scalar_lea.hbm %s1, %s150
          %s152 = sshll.u32 [#allocation6], 4
          %s153 = int_to_ptr.vmem [resolvable:$true] %s152
          %158 = dma.hbm_to_vmem [thread:$0]  %s151, 256, %s153, [#allocation7], 128, 128, 8
        $region16: #{tpu_custom_call.1} parent=11 // pred_fallthru
          _
        // Predicated region
        $region17: #{tpu_custom_call.1} parent=11 // pred_check
          %p159 = pneg %p101
        $region18: #{tpu_custom_call.1} parent=11 // pred_check_branch
          %161 = sbr.rel (%p159) target = $region20
        $region19: #{tpu_custom_call.1} parent=11 // pred_region
          %s163 = ssub.s32 512, 512
          %164 = vsyncadd [#allocation7], %s163
          %s165 = sshll.u32 [#allocation8], 4
          %s166 = int_to_ptr.vmem [resolvable:$true] %s165
          %171 = dma.hbm_to_vmem [thread:$0]  %s2, 512, %s166, [#allocation7], 128, 128, 8
        $region20: #{tpu_custom_call.1} parent=11 // pred_fallthru
          _
      $region12: #{tpu_custom_call.1} parent=5 // pred_fallthru
        _
      %p172 = scmp.lt.s32.totalorder %s16, 2
      // Predicated region
      $region21: #{tpu_custom_call.1} parent=5 // pred_check
        %p173 = pneg %p172
      $region22: #{tpu_custom_call.1} parent=5 // pred_check_branch
        %175 = sbr.rel (%p173) target = $region24
      $region23: #{tpu_custom_call.1} parent=5 // pred_region
        // Predicated region
        $region25: #{tpu_custom_call.1} parent=23 // pred_check
          %p176 = pneg %p48
        $region26: #{tpu_custom_call.1} parent=23 // pred_check_branch
          %178 = sbr.rel (%p176) target = $region28
        $region27: #{tpu_custom_call.1} parent=23 // pred_region
          %s179 = sand.u32 %s38, 1
          %s180 = scalar_lea.sflag [#allocation4], %s179
          %s181 = sand.u32 %s38, 1
          %s182 = smul.addr %s181, 8
          %s183 = scalar_lea.vmem [#allocation3], %s182
          %s185 = ssub.s32 128, 128
          %186 = vsyncadd %s180, %s185
          %s187 = smul.addr %s24, 128
          %s188 = scalar_lea.hbm %s0, %s187
          %s190 = sshll.u32 %s183, 4
          %s191 = int_to_ptr.vmem [resolvable:$true] %s190
          %193 = dma.hbm_to_vmem [thread:$0]  %s188, 128, %s191, %s180
        $region28: #{tpu_custom_call.1} parent=23 // pred_fallthru
          _
      $region24: #{tpu_custom_call.1} parent=5 // pred_fallthru
        _
      %p194 = scmp.le.s32.totalorder 1, %s16
      %p195 = scmp.lt.s32.totalorder %s16, 3
      %p196 = pnand %p194, %p195
      %p197 = pneg %p196
      // Predicated region
      $region29: #{tpu_custom_call.1} parent=5 // pred_check
        _
      $region30: #{tpu_custom_call.1} parent=5 // pred_check_branch
        %199 = sbr.rel (%p196) target = $region32
      $region31: #{tpu_custom_call.1} parent=5 // pred_region
        %s200 = ssub.s32 %s16, 1
        %s201 = sand.u32 %s41, 1
        %s202 = scalar_lea.sflag [#allocation4], %s201
        %s203 = sand.u32 %s41, 1
        %s204 = smul.addr %s203, 8
        %s205 = scalar_lea.vmem [#allocation3], %s204
        // Predicated region
        $region33: #{tpu_custom_call.1} parent=31 // pred_check
          %p206 = pneg %p54
        $region34: #{tpu_custom_call.1} parent=31 // pred_check_branch
          %208 = sbr.rel (%p206) target = $region36
        $region35: #{tpu_custom_call.1} parent=31 // pred_region
          %209 = dma.done %s202, 128
        $region36: #{tpu_custom_call.1} parent=31 // pred_fallthru
          _
        // Predicated region
        $region37: #{tpu_custom_call.1} parent=31 // pred_check
          %p210 = pneg %p80
        $region38: #{tpu_custom_call.1} parent=31 // pred_check_branch
          %212 = sbr.rel (%p210) target = $region40
        $region39: #{tpu_custom_call.1} parent=31 // pred_region
          %213 = dma.done [#allocation7], 256
        $region40: #{tpu_custom_call.1} parent=31 // pred_fallthru
          _
        // Predicated region
        $region41: #{tpu_custom_call.1} parent=31 // pred_check
          %p214 = pneg %p101
        $region42: #{tpu_custom_call.1} parent=31 // pred_check_branch
          %216 = sbr.rel (%p214) target = $region44
        $region43: #{tpu_custom_call.1} parent=31 // pred_region
          %217 = dma.done [#allocation7], 512
        $region44: #{tpu_custom_call.1} parent=31 // pred_fallthru
          _
        %s218 = sand.u32 %s41, 1
        %s219 = scalar_lea.sflag [#allocation4], %s218
        %s220 = sand.u32 %s41, 1
        %s221 = smul.addr %s220, 8
        %s222 = scalar_lea.vmem [#allocation3], %s221
        %p223 = pneg %p54
        %p224 = pneg %p51
        %p225 = pneg %p80
        %p226 = pneg %p77
        %p227 = pneg %p101
        %p228 = pneg %p98
        %p229 = pneg %p129
        %p230 = pneg %p126
        %s231 = sand.u32 %s116, 1
        %s232 = scalar_lea.sflag [#allocation5], %s231
        %s233 = sand.u32 %s116, 1
        %s234 = smul.addr %s233, 8
        %s235 = scalar_lea.vmem [#allocation9], %s234
        %p236 = scmp.eq.s32.totalorder %s26, 0
        // Predicated region
        $region45: #{tpu_custom_call.1} parent=31 // pred_check
          %p237 = pneg %p236
        $region46: #{tpu_custom_call.1} parent=31 // pred_check_branch
          %239 = sbr.rel (%p237) target = $region48
        $region47: #{tpu_custom_call.1} parent=31 // pred_region
          %v240 = vld [vmem:[#allocation6] sm:$0xff]
          %v241 = vld [vmem:[#allocation6 + $0x8] sm:$0xff]
          %v242 = vld [vmem:[#allocation8] sm:$0xff]
          %v243 = vld [vmem:[#allocation8 + $0x8] sm:$0xff]
          %v244 = vld [vmem:[#allocation8 + $0x10] sm:$0xff]
          %v245 = vld [vmem:[#allocation8 + $0x18] sm:$0xff]
          %vm246 = vcmask 261120
          %v248 = vsel %vm246, %v240, 0
          %v251 = vsel %vm246, %v241, 0
          %253 = vmatprep.subr.mxu0 0.0
          %254 = vmatpush1.msra.mxu0 %v242
          %255 = vmatprep.subr.mxu0 0.0
          %256 = vmatpush1.msra.mxu0 %v243
          %257 = vmatprep.subr.mxu0 0.0
          %258 = vmatpush1.msra.mxu0 %v244
          %259 = vmatprep.subr.mxu0 0.0
          %260 = vmatpush1.msra.mxu0 %v245
          %261 = vmatprep.subr.mxu0 0.0
          %262 = vmatpush1.msra.mxu0 0.0
          %263 = vmatprep.subr.mxu0 0.0
          %264 = vmatpush1.msra.mxu0 0.0
          %265 = vmatprep.subr.mxu0 0.0
          %266 = vmatpush1.msra.mxu0 0.0
          %267 = vmatprep.subr.mxu0 0.0
          %268 = vmatpush1.msra.mxu0 0.0
          %269 = vmatprep.subr.mxu0 0.0
          %270 = vmatpush1.msra.mxu0 0.0
          %271 = vmatprep.subr.mxu0 0.0
          %272 = vmatpush1.msra.mxu0 0.0
          %273 = vmatprep.subr.mxu0 0.0
          %274 = vmatpush1.msra.mxu0 0.0
          %275 = vmatprep.subr.mxu0 0.0
          %276 = vmatpush1.msra.mxu0 0.0
          %277 = vmatprep.subr.mxu0 0.0
          %278 = vmatpush1.msra.mxu0 0.0
          %279 = vmatprep.subr.mxu0 0.0
          %280 = vmatpush1.msra.mxu0 0.0
          %281 = vmatprep.subr.mxu0 0.0
          %282 = vmatpush1.msra.mxu0 0.0
          %283 = vmatprep.subr.mxu0 0.0
          %284 = vmatpush1.msra.mxu0 0.0
          %285 = vmatprep.subr.mxu0 0.0
          %286 = vmatpush1.msra.mxu0 0.0
          %287 = vmatprep.subr.mxu0 0.0
          %288 = vmatpush1.msra.mxu0 0.0
          %289 = vmatprep.subr.mxu0 0.0
          %290 = vmatpush1.msra.mxu0 0.0
          %291 = vmatprep.subr.mxu0 0.0
          %292 = vmatpush1.msra.mxu0 0.0
          %293 = vmatprep.subr.mxu0 0.0
          %294 = vmatpush1.msra.mxu0 0.0
          %295 = vmatprep.subr.mxu0 0.0
          %296 = vmatpush1.msra.mxu0 0.0
          %297 = vmatprep.subr.mxu0 0.0
          %298 = vmatpush1.msra.mxu0 0.0
          %299 = vmatprep.subr.mxu0 0.0
          %300 = vmatpush1.msra.mxu0 0.0
          %301 = vmatprep.subr.mxu0 0.0
          %302 = vmatpush1.msra.mxu0 0.0
          %303 = vmatprep.subr.mxu0 0.0
          %304 = vmatpush1.msra.mxu0 0.0
          %305 = vmatprep.subr.mxu0 0.0
          %306 = vmatpush1.msra.mxu0 0.0
          %307 = vmatprep.subr.mxu0 0.0
          %308 = vmatpush1.msra.mxu0 0.0
          %309 = vmatprep.subr.mxu0 0.0
          %310 = vmatpush1.msra.mxu0 0.0
          %311 = vmatprep.subr.mxu0 0.0
          %312 = vmatpush1.msra.mxu0 0.0
          %313 = vmatprep.subr.mxu0 0.0
          %314 = vmatpush1.msra.mxu0 0.0
          %315 = vmatprep.subr.mxu0 0.0
          %316 = vmatpush1.msra.mxu0 0.0
          %317 = vmatprep.mubr.f32.mxu0 0.0
          %318 = vmatmul.mubr.f32.gmra.mrb[0].mxu0 %v248
          %v319 = vpop.f32.mrb[0].mxu0
          %v320 = vadd.f32 0.0, %v319
          %v321 = vpop.f32.mrb[0].mxu0
          %322 = vmatprep.mubr.f32.mxu0 0.0
          %323 = vmatmul.mubr.f32.gmra.mrb[0].mxu0 %v251
          %v324 = vpop.f32.mrb[0].mxu0
          %v325 = vadd.f32 0.0, %v324
          %v326 = vpop.f32.mrb[0].mxu0
          %327 = vdwg.mxu0
          %328 = vst.msk [vmem:[#allocation2] sm:$0xff] %vm246, %v320
          %329 = vst.msk [vmem:[#allocation2 + $0x8] sm:$0xff] %vm246, %v325
          %v330 = vld [vmem:[#allocation6] sm:$0xff]
          %v331 = vld [vmem:[#allocation6 + $0x8] sm:$0xff]
          %v332 = vld [vmem:[#allocation8] sm:$0xff]
          %v333 = vld [vmem:[#allocation8 + $0x8] sm:$0xff]
          %v334 = vld [vmem:[#allocation8 + $0x10] sm:$0xff]
          %v335 = vld [vmem:[#allocation8 + $0x18] sm:$0xff]
          %338 = vrot.lane.b32.xlu0 %v330, 96
          %v339 = vpop.permute.xlu0 %338
          %340 = vrot.lane.b32.xlu0 %v331, 96
          %v341 = vpop.permute.xlu0 %340
          %v342 = vsel %vm246, %v339, 0
          %v344 = vsel %vm246, %v341, 0
          %346 = vmatprep.subr.mxu0 0.0
          %347 = vmatpush1.msra.mxu0 %v332
          %348 = vmatprep.subr.mxu0 0.0
          %349 = vmatpush1.msra.mxu0 %v333
          %350 = vmatprep.subr.mxu0 0.0
          %351 = vmatpush1.msra.mxu0 %v334
          %352 = vmatprep.subr.mxu0 0.0
          %353 = vmatpush1.msra.mxu0 %v335
          %354 = vmatprep.subr.mxu0 0.0
          %355 = vmatpush1.msra.mxu0 0.0
          %356 = vmatprep.subr.mxu0 0.0
          %357 = vmatpush1.msra.mxu0 0.0
          %358 = vmatprep.subr.mxu0 0.0
          %359 = vmatpush1.msra.mxu0 0.0
          %360 = vmatprep.subr.mxu0 0.0
          %361 = vmatpush1.msra.mxu0 0.0
          %362 = vmatprep.subr.mxu0 0.0
          %363 = vmatpush1.msra.mxu0 0.0
          %364 = vmatprep.subr.mxu0 0.0
          %365 = vmatpush1.msra.mxu0 0.0
          %366 = vmatprep.subr.mxu0 0.0
          %367 = vmatpush1.msra.mxu0 0.0
          %368 = vmatprep.subr.mxu0 0.0
          %369 = vmatpush1.msra.mxu0 0.0
          %370 = vmatprep.subr.mxu0 0.0
          %371 = vmatpush1.msra.mxu0 0.0
          %372 = vmatprep.subr.mxu0 0.0
          %373 = vmatpush1.msra.mxu0 0.0
          %374 = vmatprep.subr.mxu0 0.0
          %375 = vmatpush1.msra.mxu0 0.0
          %376 = vmatprep.subr.mxu0 0.0
          %377 = vmatpush1.msra.mxu0 0.0
          %378 = vmatprep.subr.mxu0 0.0
          %379 = vmatpush1.msra.mxu0 0.0
          %380 = vmatprep.subr.mxu0 0.0
          %381 = vmatpush1.msra.mxu0 0.0
          %382 = vmatprep.subr.mxu0 0.0
          %383 = vmatpush1.msra.mxu0 0.0
          %384 = vmatprep.subr.mxu0 0.0
          %385 = vmatpush1.msra.mxu0 0.0
          %386 = vmatprep.subr.mxu0 0.0
          %387 = vmatpush1.msra.mxu0 0.0
          %388 = vmatprep.subr.mxu0 0.0
          %389 = vmatpush1.msra.mxu0 0.0
          %390 = vmatprep.subr.mxu0 0.0
          %391 = vmatpush1.msra.mxu0 0.0
          %392 = vmatprep.subr.mxu0 0.0
          %393 = vmatpush1.msra.mxu0 0.0
          %394 = vmatprep.subr.mxu0 0.0
          %395 = vmatpush1.msra.mxu0 0.0
          %396 = vmatprep.subr.mxu0 0.0
          %397 = vmatpush1.msra.mxu0 0.0
          %398 = vmatprep.subr.mxu0 0.0
          %399 = vmatpush1.msra.mxu0 0.0
          %400 = vmatprep.subr.mxu0 0.0
          %401 = vmatpush1.msra.mxu0 0.0
          %402 = vmatprep.subr.mxu0 0.0
          %403 = vmatpush1.msra.mxu0 0.0
          %404 = vmatprep.subr.mxu0 0.0
          %405 = vmatpush1.msra.mxu0 0.0
          %406 = vmatprep.subr.mxu0 0.0
          %407 = vmatpush1.msra.mxu0 0.0
          %408 = vmatprep.subr.mxu0 0.0
          %409 = vmatpush1.msra.mxu0 0.0
          %410 = vmatprep.mubr.f32.mxu0 0.0
          %411 = vmatmul.mubr.f32.gmra.mrb[0].mxu0 %v342
          %v412 = vpop.f32.mrb[0].mxu0
          %v413 = vadd.f32 0.0, %v412
          %v414 = vpop.f32.mrb[0].mxu0
          %415 = vmatprep.mubr.f32.mxu0 0.0
          %416 = vmatmul.mubr.f32.gmra.mrb[0].mxu0 %v344
          %v417 = vpop.f32.mrb[0].mxu0
          %v418 = vadd.f32 0.0, %v417
          %v419 = vpop.f32.mrb[0].mxu0
          %420 = vdwg.mxu0
          %423 = vrot.lane.b32.xlu0 %v413, 32
          %v424 = vpop.permute.xlu0 %423
          %425 = vrot.lane.b32.xlu0 %v418, 32
          %v426 = vpop.permute.xlu0 %425
          %vm429 = vcmask 523520
          %430 = vst.msk [vmem:[#allocation2] sm:$0xff] %vm429, %v424
          %431 = vst.msk [vmem:[#allocation2 + $0x8] sm:$0xff] %vm429, %v426
        $region48: #{tpu_custom_call.1} parent=31 // pred_fallthru
          _
        %v432 = vld [vmem:[%s205] sm:$0xff]
        %v433 = vld [vmem:[#allocation2] sm:$0xff]
        %v434 = vld [vmem:[#allocation2 + $0x8] sm:$0xff]
        %vm435 = vcmask 130048
        %v437 = vsel %vm435, %v432, 0
        %439 = vmatprep.subr.mxu0 0.0
        %440 = vmatpush1.msra.mxu0 %v433
        %441 = vmatprep.subr.mxu0 0.0
        %442 = vmatpush1.msra.mxu0 %v434
        %443 = vmatprep.subr.mxu0 0.0
        %444 = vmatpush1.msra.mxu0 0.0
        %445 = vmatprep.subr.mxu0 0.0
        %446 = vmatpush1.msra.mxu0 0.0
        %447 = vmatprep.subr.mxu0 0.0
        %448 = vmatpush1.msra.mxu0 0.0
        %449 = vmatprep.subr.mxu0 0.0
        %450 = vmatpush1.msra.mxu0 0.0
        %451 = vmatprep.subr.mxu0 0.0
        %452 = vmatpush1.msra.mxu0 0.0
        %453 = vmatprep.subr.mxu0 0.0
        %454 = vmatpush1.msra.mxu0 0.0
        %455 = vmatprep.subr.mxu0 0.0
        %456 = vmatpush1.msra.mxu0 0.0
        %457 = vmatprep.subr.mxu0 0.0
        %458 = vmatpush1.msra.mxu0 0.0
        %459 = vmatprep.subr.mxu0 0.0
        %460 = vmatpush1.msra.mxu0 0.0
        %461 = vmatprep.subr.mxu0 0.0
        %462 = vmatpush1.msra.mxu0 0.0
        %463 = vmatprep.subr.mxu0 0.0
        %464 = vmatpush1.msra.mxu0 0.0
        %465 = vmatprep.subr.mxu0 0.0
        %466 = vmatpush1.msra.mxu0 0.0
        %467 = vmatprep.subr.mxu0 0.0
        %468 = vmatpush1.msra.mxu0 0.0
        %469 = vmatprep.subr.mxu0 0.0
        %470 = vmatpush1.msra.mxu0 0.0
        %471 = vmatprep.subr.mxu0 0.0
        %472 = vmatpush1.msra.mxu0 0.0
        %473 = vmatprep.subr.mxu0 0.0
        %474 = vmatpush1.msra.mxu0 0.0
        %475 = vmatprep.subr.mxu0 0.0
        %476 = vmatpush1.msra.mxu0 0.0
        %477 = vmatprep.subr.mxu0 0.0
        %478 = vmatpush1.msra.mxu0 0.0
        %479 = vmatprep.subr.mxu0 0.0
        %480 = vmatpush1.msra.mxu0 0.0
        %481 = vmatprep.subr.mxu0 0.0
        %482 = vmatpush1.msra.mxu0 0.0
        %483 = vmatprep.subr.mxu0 0.0
        %484 = vmatpush1.msra.mxu0 0.0
        %485 = vmatprep.subr.mxu0 0.0
        %486 = vmatpush1.msra.mxu0 0.0
        %487 = vmatprep.subr.mxu0 0.0
        %488 = vmatpush1.msra.mxu0 0.0
        %489 = vmatprep.subr.mxu0 0.0
        %490 = vmatpush1.msra.mxu0 0.0
        %491 = vmatprep.subr.mxu0 0.0
        %492 = vmatpush1.msra.mxu0 0.0
        %493 = vmatprep.subr.mxu0 0.0
        %494 = vmatpush1.msra.mxu0 0.0
        %495 = vmatprep.subr.mxu0 0.0
        %496 = vmatpush1.msra.mxu0 0.0
        %497 = vmatprep.subr.mxu0 0.0
        %498 = vmatpush1.msra.mxu0 0.0
        %499 = vmatprep.subr.mxu0 0.0
        %500 = vmatpush1.msra.mxu0 0.0
        %501 = vmatprep.subr.mxu0 0.0
        %502 = vmatpush1.msra.mxu0 0.0
        %503 = vmatprep.mubr.f32.mxu0 0.0
        %504 = vmatmul.mubr.f32.gmra.mrb[0].mxu0 %v437
        %v505 = vpop.f32.mrb[0].mxu0
        %v506 = vadd.f32 0.0, %v505
        %v507 = vpop.f32.mrb[0].mxu0
        %508 = vdwg.mxu0
        %v509 = vtanh.pop %v506
        %vm510 = vcmask 523264
        %511 = vst.msk [vmem:[%s235] sm:$0xff] %vm510, %v509
        %s512 = sand.u32 %s116, 1
        %s513 = scalar_lea.sflag [#allocation5], %s512
        %s514 = sand.u32 %s116, 1
        %s515 = smul.addr %s514, 8
        %s516 = scalar_lea.vmem [#allocation9], %s515
        // Predicated region
        $region49: #{tpu_custom_call.1} parent=31 // pred_check
          %p517 = pneg %p126
        $region50: #{tpu_custom_call.1} parent=31 // pred_check_branch
          %519 = sbr.rel (%p517) target = $region52
        $region51: #{tpu_custom_call.1} parent=31 // pred_region
          %s521 = ssub.s32 128, 128
          %522 = vsyncadd %s513, %s521
          %s523 = sadd.s32 %s25, %s26
          %s524 = smul.addr %s523, 128
          %s525 = scalar_lea.hbm %s3, %s524
          %s527 = sshll.u32 %s516, 4
          %s528 = int_to_ptr.vmem [resolvable:$true] %s527
          %530 = dma.vmem_to_hbm [thread:$0]  %s528, 128, %s525, %s513
        $region52: #{tpu_custom_call.1} parent=31 // pred_fallthru
          _
      $region32: #{tpu_custom_call.1} parent=5 // pred_fallthru
        _
      %p531 = scmp.le.s32.totalorder 2, %s16
      // Predicated region
      $region53: #{tpu_custom_call.1} parent=5 // pred_check
        %p532 = pneg %p531
      $region54: #{tpu_custom_call.1} parent=5 // pred_check_branch
        %534 = sbr.rel (%p532) target = $region56
      $region55: #{tpu_custom_call.1} parent=5 // pred_region
        %s535 = ssub.s32 %s16, 2
        // Predicated region
        $region57: #{tpu_custom_call.1} parent=55 // pred_check
          %p536 = pneg %p132
        $region58: #{tpu_custom_call.1} parent=55 // pred_check_branch
          %538 = sbr.rel (%p536) target = $region60
        $region59: #{tpu_custom_call.1} parent=55 // pred_region
          %s539 = sand.u32 %s117, 1
          %s540 = scalar_lea.sflag [#allocation5], %s539
          %s541 = sand.u32 %s117, 1
          %s542 = smul.addr %s541, 8
          %s543 = scalar_lea.vmem [#allocation9], %s542
          %544 = dma.done %s540, 128
        $region60: #{tpu_custom_call.1} parent=55 // pred_fallthru
          _
      $region56: #{tpu_custom_call.1} parent=5 // pred_fallthru
        _
    $region6: #{tpu_custom_call.1} parent=1 // loop_footer
      %s20 = sadd.s32 1, %s16
    $region7: #{tpu_custom_call.1} parent=1 // loop_footer_branch
      %15 = sbr.rel target = $region3
    $region8: #{tpu_custom_call.1} parent=1 // loop_exit
      _
    %545 = vsyncpa [#allocation4], 1
    %s546 = scalar_lea.sflag [#allocation4], 1
    %547 = vsyncpa %s546, 1
    %548 = vsyncpa [#allocation7], 1
    %549 = vsyncpa [#allocation5], 1
    %s550 = scalar_lea.sflag [#allocation5], 1
    %551 = vsyncpa %s550, 1

</llo_original>
